<compile_context>
chip_gen: v6e
topology: v6e:2x2x1
jax: 0.10.0
libtpu: 0.0.40
codegen_flags: <defaults>
</compile_context>

<pallas_src>
import functools

import jax
import jax.numpy as jnp
from jax.experimental import pallas as pl
from jax.experimental.pallas import tpu as pltpu

NEG_INF = -1e30
LN_EPS = 1e-5
_FULL_M_CAP = 512          # full-M tiles up to this many rows (stream weights once)


def _default_vmem_limit():
    """Per-generation scoped-VMEM budget: ~48 MiB on v7x (64 MiB phys),
    ~96 MiB on v5e/v6e (128 MiB phys)."""
    try:
        cap = int(pltpu.get_tpu_info().vmem_capacity_bytes)
    except Exception:
        cap = 64 * 1024 * 1024
    return max(32 * 1024 * 1024, min(96 * 1024 * 1024, (cap * 3) // 4))


VMEM_LIMIT = _default_vmem_limit()


def _pick_tile(dim, target, align):
    """Largest tile <= target that divides `dim` and respects (8,128) alignment.
    Falls back to the full dimension (always a legal block shape)."""
    if dim <= target:
        return dim
    t = min(target, dim)
    t -= t % align
    while t >= align:
        if dim % t == 0:
            return t
        t -= align
    return dim


def _m_tile(M):
    """Full-M tile whenever it fits comfortably in VMEM (the common CLIP-text
    case), otherwise fall back to a divisor tile."""
    return M if M <= _FULL_M_CAP else _pick_tile(M, 256, 8)


# ----------------------------- Pallas kernels ------------------------------

def _ln_matmul_kernel(x_ref, g_ref, b_ref, w_ref, bias_ref, o_ref, xh_ref,
                      *, activation):
    """Fused LayerNorm(x) @ W + bias (+ quick_gelu).

    LN is computed once per M tile (j == 0) into the bf16 scratch `xh_ref`
    and reused for every N tile (the N axis is "arbitrary")."""
    @pl.when(pl.program_id(1) == 0)
    def _():
        x = x_ref[...].astype(jnp.float32)
        mean = jnp.mean(x, axis=-1, keepdims=True)
        xc = x - mean
        var = jnp.mean(xc * xc, axis=-1, keepdims=True)
        inv = jax.lax.rsqrt(var + LN_EPS)
        xh_ref[...] = (xc * inv * g_ref[...] + b_ref[...]).astype(xh_ref.dtype)

    y = jnp.dot(xh_ref[...], w_ref[...],
                preferred_element_type=jnp.float32) + bias_ref[...]
    if activation == "quick_gelu":              # CLIP uses quick_gelu
        y = y * jax.nn.sigmoid(1.702 * y)
    o_ref[...] = y.astype(o_ref.dtype)


def ln_matmul(x, gamma, beta, w, bias, activation=None,
              out_dtype=jnp.bfloat16, tn=512):
    M, K = x.shape
    _, N = w.shape
    tm = _m_tile(M)                        # full-M -> weights streamed once
    tn = _pick_tile(N, tn, 128)
    kern = functools.partial(_ln_matmul_kernel, activation=activation)
    return pl.pallas_call(
        kern,
        out_shape=jax.ShapeDtypeStruct((M, N), out_dtype),
        grid=(M // tm, N // tn),
        in_specs=[pl.BlockSpec((tm, K), lambda i, j: (i, 0)),
                  pl.BlockSpec((1, K), lambda i, j: (0, 0)),
                  pl.BlockSpec((1, K), lambda i, j: (0, 0)),
                  pl.BlockSpec((K, tn), lambda i, j: (0, j)),
                  pl.BlockSpec((1, tn), lambda i, j: (0, j))],
        out_specs=pl.BlockSpec((tm, tn), lambda i, j: (i, j)),
        scratch_shapes=[pltpu.VMEM((tm, K), jnp.bfloat16)],
        compiler_params=pltpu.CompilerParams(
            dimension_semantics=("parallel", "arbitrary"),
            vmem_limit_bytes=VMEM_LIMIT),
    )(x, gamma.reshape(1, K).astype(jnp.float32),
      beta.reshape(1, K).astype(jnp.float32), w,
      bias.reshape(1, N).astype(jnp.float32))


def _matmul_res_kernel(x_ref, w_ref, bias_ref, res_ref, o_ref):
    """x @ W + bias + residual, fused (saves a full HBM read/write pass)."""
    y = jnp.dot(x_ref[...], w_ref[...], preferred_element_type=jnp.float32)
    y = y + bias_ref[...] + res_ref[...].astype(jnp.float32)
    o_ref[...] = y.astype(o_ref.dtype)


def matmul_residual(x, w, bias, res, out_dtype=jnp.float32, tn=512):
    M, K = x.shape
    _, N = w.shape
    tm = _m_tile(M)                        # full-M -> weights streamed once
    tn = _pick_tile(N, tn, 128)
    return pl.pallas_call(
        _matmul_res_kernel,
        out_shape=jax.ShapeDtypeStruct((M, N), out_dtype),
        grid=(M // tm, N // tn),
        in_specs=[pl.BlockSpec((tm, K), lambda i, j: (i, 0)),
                  pl.BlockSpec((K, tn), lambda i, j: (0, j)),
                  pl.BlockSpec((1, tn), lambda i, j: (0, j)),
                  pl.BlockSpec((tm, tn), lambda i, j: (i, j))],
        out_specs=pl.BlockSpec((tm, tn), lambda i, j: (i, j)),
        compiler_params=pltpu.CompilerParams(
            dimension_semantics=("parallel", "parallel"),
            vmem_limit_bytes=VMEM_LIMIT),
    )(x, w, bias.reshape(1, N).astype(jnp.float32), res)


def _layernorm_kernel(x_ref, g_ref, b_ref, o_ref):
    x = x_ref[...].astype(jnp.float32)
    mean = jnp.mean(x, axis=-1, keepdims=True)
    xc = x - mean
    var = jnp.mean(xc * xc, axis=-1, keepdims=True)
    inv = jax.lax.rsqrt(var + LN_EPS)
    o_ref[...] = (xc * inv * g_ref[...] + b_ref[...]).astype(o_ref.dtype)


def layernorm(x, gamma, beta, out_dtype=jnp.float32, tm=512):
    M, H = x.shape
    tm = _pick_tile(M, tm, 8)
    return pl.pallas_call(
        _layernorm_kernel,
        out_shape=jax.ShapeDtypeStruct((M, H), out_dtype),
        grid=(M // tm,),
        in_specs=[pl.BlockSpec((tm, H), lambda i: (i, 0)),
                  pl.BlockSpec((1, H), lambda i: (0, 0)),
                  pl.BlockSpec((1, H), lambda i: (0, 0))],
        out_specs=pl.BlockSpec((tm, H), lambda i: (i, 0)),
        compiler_params=pltpu.CompilerParams(
            dimension_semantics=("parallel",),
            vmem_limit_bytes=VMEM_LIMIT),
    )(x, gamma.reshape(1, H).astype(jnp.float32),
      beta.reshape(1, H).astype(jnp.float32))


def _attn_pair_kernel(qkv_ref, o_ref, *, head_dim, scale):
    """One (batch, head-pair) per grid step.

    qkv_ref: [S, 3*2*Dh] laid out [q_pair | k_pair | v_pair] (128-lane aligned
    for real CLIP where Dh=64).  o_ref: [S, 2*Dh] lane-dense output block."""
    S = qkv_ref.shape[0]
    pw = 2 * head_dim
    # Additive causal-mask bias, built once per grid step, shared by both heads.
    row = jax.lax.broadcasted_iota(jnp.int32, (S, S), 0)
    col = jax.lax.broadcasted_iota(jnp.int32, (S, S), 1)
    mask = jnp.where(col <= row, 0.0, NEG_INF).astype(jnp.float32)

    q_pair = qkv_ref[:, 0:pw]
    k_pair = qkv_ref[:, pw:2 * pw]
    v_pair = qkv_ref[:, 2 * pw:3 * pw]

    outs = []
    for u in range(2):                              # two heads per pair
        # fold softmax scale into q (S*Dh mul instead of S*S)
        q = (q_pair[:, u * head_dim:(u + 1) * head_dim].astype(jnp.float32)
             * scale).astype(k_pair.dtype)
        k = k_pair[:, u * head_dim:(u + 1) * head_dim]
        v = v_pair[:, u * head_dim:(u + 1) * head_dim]
        # Q @ K^T via dot_general contracting dim 1 of both (no XLU transpose).
        s = jax.lax.dot_general(q, k, (((1,), (1,)), ((), ())),
                                preferred_element_type=jnp.float32)
        s = s + mask
        m = jnp.max(s, axis=-1, keepdims=True)
        p = jnp.exp(s - m)
        l = jnp.sum(p, axis=-1, keepdims=True)
        o = jnp.dot(p.astype(v.dtype), v, preferred_element_type=jnp.float32)
        outs.append(o / l)                          # exact normalization
    o_ref[...] = jnp.concatenate(outs, axis=-1).astype(o_ref.dtype)


def causal_attention(qkv, n_heads):
    """qkv: [B, S, 3H] pair-interleaved (bf16) -> [B, S, H] (bf16).

    Grid is (B, n_heads//2): one head pair per step, giving v7x's two
    TensorCores parallel work even at batch 1-2."""
    B, S, W = qkv.shape
    H = W // 3
    Dh = H // n_heads
    n_pairs = n_heads // 2
    pw = 2 * Dh
    kern = functools.partial(_attn_pair_kernel, head_dim=Dh, scale=Dh ** -0.5)
    return pl.pallas_call(
        kern,
        out_shape=jax.ShapeDtypeStruct((B, S, H), qkv.dtype),
        grid=(B, n_pairs),
        in_specs=[pl.BlockSpec((None, S, 3 * pw), lambda b, p: (b, 0, p))],
        out_specs=pl.BlockSpec((None, S, pw), lambda b, p: (b, 0, p)),
        compiler_params=pltpu.CompilerParams(
            dimension_semantics=("parallel", "parallel"),
            vmem_limit_bytes=VMEM_LIMIT),
    )(qkv)


# ------------------------- CLIP text transformer ---------------------------

def clip_encoder_layer(x, p, n_heads):
    B, S, H = x.shape
    xf = x.reshape(B * S, H)                                   # f32 residual

    # --- self attention block (pre-LN, fused LN1 + pair-interleaved QKV) ---
    qkv = ln_matmul(xf, p["ln1_g"], p["ln1_b"], p["wqkv"], p["bqkv"])   # [M,3H]
    attn = causal_attention(qkv.reshape(B, S, 3 * H), n_heads)          # [B,S,H]
    # output projection + residual add, fused (f32 residual stream)
    xf = matmul_residual(attn.reshape(B * S, H), p["wo"], p["bo"], xf)

    # --- MLP block (pre-LN, quick_gelu), LN2 fused into fc1 ---
    h = ln_matmul(xf, p["ln2_g"], p["ln2_b"], p["w1"], p["b1"],
                  activation="quick_gelu")                               # [M,4H]
    xf = matmul_residual(h, p["w2"], p["b2"], xf)                        # + res

    return xf.reshape(B, S, H)


def frozen_clip_embedder_forward(tokens, params, n_heads):
    """tokens: int32 [B, S] -> last_hidden_state float32 [B, S, H]."""
    B, S = tokens.shape
    H = params["tok_emb"].shape[1]
    # embedding lookup + position embedding (glue: gather has no tiled hot path)
    x = jnp.take(params["tok_emb"], tokens, axis=0) + params["pos_emb"][None, :S, :]
    x = x.astype(jnp.float32)                      # residual stream stays f32
    # pad S to a multiple of 8 so all sublane tiles / stores are clean
    s_pad = ((S + 7) // 8) * 8
    if s_pad != S:
        x = jnp.pad(x, ((0, 0), (0, s_pad - S), (0, 0)))
    for layer_p in params["layers"]:
        x = clip_encoder_layer(x, layer_p, n_heads)
    # final layer norm -> f32 last_hidden_state
    xf = layernorm(x.reshape(B * s_pad, H), params["lnf_g"], params["lnf_b"],
                   out_dtype=jnp.float32)
    return xf.reshape(B, s_pad, H)[:, :S, :]


# ----------------------------- parameter init ------------------------------

def interleave_qkv(q, k, v, n_heads):
    """Reorder Q/K/V (last dim H each) into per-head-pair [q|k|v] blocks, the
    layout the attention kernel reads.  (Loading a HF checkpoint requires the
    same column permutation.)"""
    H = q.shape[-1]
    pw = 2 * (H // n_heads)
    parts = []
    for p in range(n_heads // 2):
        sl = slice(p * pw, (p + 1) * pw)
        parts += [q[..., sl], k[..., sl], v[..., sl]]
    return jnp.concatenate(parts, axis=-1)


def init_params(key, vocab, H, mlp, n_layers, max_len, n_heads):
    assert n_heads % 2 == 0, "attention kernel processes heads in pairs"
    wdt = jnp.bfloat16     # weights feed the MXU in bf16
    k_tok, k_pos, *k_layers = jax.random.split(key, 2 + n_layers)
    params = {
        "tok_emb": 0.02 * jax.random.normal(k_tok, (vocab, H), jnp.float32),
        "pos_emb": 0.02 * jax.random.normal(k_pos, (max_len, H), jnp.float32),
        "lnf_g": jnp.ones((H,), jnp.float32),
        "lnf_b": jnp.zeros((H,), jnp.float32),
        "layers": [],
    }
    for kl in k_layers:
        ks = jax.random.split(kl, 6)
        wq = 0.02 * jax.random.normal(ks[0], (H, H), jnp.float32)
        wk = 0.02 * jax.random.normal(ks[1], (H, H), jnp.float32)
        wv = 0.02 * jax.random.normal(ks[2], (H, H), jnp.float32)
        bq = jnp.zeros((H,), jnp.float32)
        params["layers"].append(dict(
            ln1_g=jnp.ones((H,), jnp.float32), ln1_b=jnp.zeros((H,), jnp.float32),
            # fused, pair-interleaved Q/K/V projection: [H, 3H] weight, [3H] bias
            wqkv=interleave_qkv(wq, wk, wv, n_heads).astype(wdt),
            bqkv=interleave_qkv(bq, bq, bq, n_heads),
            wo=(0.02 * jax.random.normal(ks[3], (H, H), jnp.float32)).astype(wdt),
            bo=jnp.zeros((H,), jnp.float32),
            ln2_g=jnp.ones((H,), jnp.float32), ln2_b=jnp.zeros((H,), jnp.float32),
            w1=(0.02 * jax.random.normal(ks[4], (H, mlp), jnp.float32)).astype(wdt),
            b1=jnp.zeros((mlp,), jnp.float32),
            w2=(0.02 * jax.random.normal(ks[5], (mlp, H), jnp.float32)).astype(wdt),
            b2=jnp.zeros((H,), jnp.float32),
        ))
    return params


if __name__ == "__main__":
    # Small analog of CLIP ViT-L/14 text encoder (real: hidden=768, L=12, heads=12, S=77)
    B, S, H, N_HEADS, N_LAYERS, VOCAB = 2, 8, 64, 2, 2, 100
    MLP = 4 * H

    key = jax.random.PRNGKey(0)
    k_params, k_tok = jax.random.split(key)
    params = init_params(k_params, VOCAB, H, MLP, N_LAYERS, max_len=S,
                         n_heads=N_HEADS)
    # "tokenized text": deterministic synthetic token ids padded to max_length S
    tokens = jax.random.randint(k_tok, (B, S), 0, VOCAB, dtype=jnp.int32)

    z = frozen_clip_embedder_forward(tokens, params, N_HEADS)
    z = jax.block_until_ready(z)
    assert z.shape == (B, S, H) and z.dtype == jnp.float32
    print("KERNEL_OK")
</pallas_src>

<mosaic_0001>
module attributes {stable_mosaic.version = 11 : i64} {
  func.func @_ln_matmul_kernel(%arg0: i32, %arg1: i32, %arg2: memref<16x64xf32, #tpu.memory_space<vmem>>, %arg3: memref<1x64xf32, #tpu.memory_space<vmem>>, %arg4: memref<1x64xf32, #tpu.memory_space<vmem>>, %arg5: memref<64x192xbf16, #tpu.memory_space<vmem>>, %arg6: memref<1x192xf32, #tpu.memory_space<vmem>>, %arg7: memref<16x192xbf16, #tpu.memory_space<vmem>>, %arg8: memref<16x64xbf16, #tpu.memory_space<vmem>>) attributes {dimension_semantics = [#tpu.dimension_semantics<parallel>, #tpu.dimension_semantics<arbitrary>], iteration_bounds = array<i64: 1, 1>, scalar_prefetch = 0 : i64, scratch_operands = 1 : i64, tpu.core_type = #tpu.core_type<tc>, window_params = [{transform_indices = @transform_0, window_bounds = array<i64: 16, 64>}, {pipeline_mode = #tpu.pipeline_mode<synchronous>, transform_indices = @transform_1, window_bounds = array<i64: 1, 64>}, {pipeline_mode = #tpu.pipeline_mode<synchronous>, transform_indices = @transform_2, window_bounds = array<i64: 1, 64>}, {transform_indices = @transform_3, window_bounds = array<i64: 64, 192>}, {transform_indices = @transform_4, window_bounds = array<i64: 1, 192>}, {transform_indices = @transform_5, window_bounds = array<i64: 16, 192>}]} {
    %c0_i32 = arith.constant 0 : i32
    %0 = arith.cmpi eq, %arg1, %c0_i32 : i32
    %1 = arith.extui %0 : i1 to i32
    %c0_i32_0 = arith.constant 0 : i32
    %2 = arith.cmpi ne, %1, %c0_i32_0 : i32
    scf.if %2 {
      %c0_8 = arith.constant 0 : index
      %c0_9 = arith.constant 0 : index
      %11 = vector.load %arg2[%c0_8, %c0_9] : memref<16x64xf32, #tpu.memory_space<vmem>>, vector<16x64xf32>
      %cst_10 = arith.constant dense<0.000000e+00> : vector<16xf32>
      %12 = vector.multi_reduction <add>, %11, %cst_10 [1] : vector<16x64xf32> to vector<16xf32>
      %13 = vector.shape_cast %12 : vector<16xf32> to vector<16x1xf32>
      %cst_11 = arith.constant 6.400000e+01 : f32
      %14 = vector.broadcast %cst_11 : f32 to vector<16x1xf32>
      %15 = arith.divf %13, %14 : vector<16x1xf32>
      %16 = vector.broadcast %15 : vector<16x1xf32> to vector<16x64xf32>
      %17 = arith.subf %11, %16 : vector<16x64xf32>
      %18 = arith.mulf %17, %17 : vector<16x64xf32>
      %cst_12 = arith.constant dense<0.000000e+00> : vector<16xf32>
      %19 = vector.multi_reduction <add>, %18, %cst_12 [1] : vector<16x64xf32> to vector<16xf32>
      %20 = vector.shape_cast %19 : vector<16xf32> to vector<16x1xf32>
      %cst_13 = arith.constant 6.400000e+01 : f32
      %21 = vector.broadcast %cst_13 : f32 to vector<16x1xf32>
      %22 = arith.divf %20, %21 : vector<16x1xf32>
      %cst_14 = arith.constant 9.99999974E-6 : f32
      %23 = vector.broadcast %cst_14 : f32 to vector<16x1xf32>
      %24 = arith.addf %22, %23 : vector<16x1xf32>
      %25 = math.rsqrt %24 : vector<16x1xf32>
      %26 = vector.broadcast %25 : vector<16x1xf32> to vector<16x64xf32>
      %27 = arith.mulf %17, %26 : vector<16x64xf32>
      %c0_15 = arith.constant 0 : index
      %c0_16 = arith.constant 0 : index
      %28 = vector.load %arg3[%c0_15, %c0_16] : memref<1x64xf32, #tpu.memory_space<vmem>>, vector<1x64xf32>
      %29 = vector.broadcast %28 : vector<1x64xf32> to vector<16x64xf32>
      %30 = arith.mulf %27, %29 : vector<16x64xf32>
      %c0_17 = arith.constant 0 : index
      %c0_18 = arith.constant 0 : index
      %31 = vector.load %arg4[%c0_17, %c0_18] : memref<1x64xf32, #tpu.memory_space<vmem>>, vector<1x64xf32>
      %32 = vector.broadcast %31 : vector<1x64xf32> to vector<16x64xf32>
      %33 = arith.addf %30, %32 : vector<16x64xf32>
      %34 = arith.truncf %33 : vector<16x64xf32> to vector<16x64xbf16>
      %c0_19 = arith.constant 0 : index
      %c0_20 = arith.constant 0 : index
      %35 = vector.load %arg8[%c0_19, %c0_20] : memref<16x64xbf16, #tpu.memory_space<vmem>>, vector<16x64xbf16>
      tpu.vector_store %arg8[%c0_19, %c0_20], %34 {strides = array<i32>} : memref<16x64xbf16, #tpu.memory_space<vmem>>, vector<16x64xbf16>,
    } else {
    }
    %c0 = arith.constant 0 : index
    %c0_1 = arith.constant 0 : index
    %3 = vector.load %arg8[%c0, %c0_1] : memref<16x64xbf16, #tpu.memory_space<vmem>>, vector<16x64xbf16>
    %c0_2 = arith.constant 0 : index
    %c0_3 = arith.constant 0 : index
    %4 = vector.load %arg5[%c0_2, %c0_3] : memref<64x192xbf16, #tpu.memory_space<vmem>>, vector<64x192xbf16>
    %cst = arith.constant dense<0.000000e+00> : vector<16x192xf32>
    %5 = tpu.matmul %3, %4, %cst {dimension_numbers = #tpu.dot_dimension_numbers<[1], [0], [0], [1], [0, 0, 1, 1], [], []>} : vector<16x64xbf16>, vector<64x192xbf16>, vector<16x192xf32> -> vector<16x192xf32>
    %c0_4 = arith.constant 0 : index
    %c0_5 = arith.constant 0 : index
    %6 = vector.load %arg6[%c0_4, %c0_5] : memref<1x192xf32, #tpu.memory_space<vmem>>, vector<1x192xf32>
    %7 = vector.broadcast %6 : vector<1x192xf32> to vector<16x192xf32>
    %8 = arith.addf %5, %7 : vector<16x192xf32>
    %9 = arith.truncf %8 : vector<16x192xf32> to vector<16x192xbf16>
    %c0_6 = arith.constant 0 : index
    %c0_7 = arith.constant 0 : index
    %10 = vector.load %arg7[%c0_6, %c0_7] : memref<16x192xbf16, #tpu.memory_space<vmem>>, vector<16x192xbf16>
    tpu.vector_store %arg7[%c0_6, %c0_7], %9 {strides = array<i32>} : memref<16x192xbf16, #tpu.memory_space<vmem>>, vector<16x192xbf16>,
    return
  }
  func.func @transform_0(%arg0: i32, %arg1: i32) -> (i32, i32) {
    %c0_i32 = arith.constant 0 : i32
    %c0_i32_0 = arith.constant 0 : i32
    return %arg0, %c0_i32 : i32, i32
  }
  func.func @transform_1(%arg0: i32, %arg1: i32) -> (i32, i32) {
    %c0_i32 = arith.constant 0 : i32
    %c0_i32_0 = arith.constant 0 : i32
    %c0_i32_1 = arith.constant 0 : i32
    return %c0_i32, %c0_i32_0 : i32, i32
  }
  func.func @transform_2(%arg0: i32, %arg1: i32) -> (i32, i32) {
    %c0_i32 = arith.constant 0 : i32
    %c0_i32_0 = arith.constant 0 : i32
    %c0_i32_1 = arith.constant 0 : i32
    return %c0_i32, %c0_i32_0 : i32, i32
  }
  func.func @transform_3(%arg0: i32, %arg1: i32) -> (i32, i32) {
    %c0_i32 = arith.constant 0 : i32
    %c0_i32_0 = arith.constant 0 : i32
    return %c0_i32, %arg1 : i32, i32
  }
  func.func @transform_4(%arg0: i32, %arg1: i32) -> (i32, i32) {
    %c0_i32 = arith.constant 0 : i32
    %c0_i32_0 = arith.constant 0 : i32
    return %c0_i32, %arg1 : i32, i32
  }
  func.func @transform_5(%arg0: i32, %arg1: i32) -> (i32, i32) {
    %c0_i32 = arith.constant 0 : i32
    return %arg0, %arg1 : i32, i32
  }
}

</mosaic_0001>

<llo_original>
// kernel: tpu_custom_call.1
$region0: #{tpu_custom_call.1}
  #allocation0 [shape = 'u32[]', space=smem, size = 0x4, offset = 0x4, fixed_abs, tag = 'smem constant byte address 0x4 - core index']
  #allocation1 [shape = 'u32[144,128]{1,0:T(1,128)}', space=vmem, size = 0x12000, scoped, tag = 'internal scratch']
  #allocation2 [shape = 'bf16[16,64]{1,0:T(8,128)(2,1)}', space=vmem, size = 0x1000, scoped, tag = 'scratch operand']
  %s0 = inlined_call_operand.hbm [shape: f32[16,64], index: 0, kind: input, shape index: {}]
  %s1 = inlined_call_operand.vmem [shape: f32[1,64], index: 1, kind: input, shape index: {}]
  %s2 = inlined_call_operand.hbm [shape: f32[1,64], index: 2, kind: input, shape index: {}]
  %s3 = inlined_call_operand.hbm [shape: bf16[64,192], index: 3, kind: input, shape index: {}]
  %s4 = inlined_call_operand.vmem [shape: f32[1,192], index: 4, kind: input, shape index: {}]
  %s5 = inlined_call_operand.hbm [shape: bf16[16,192], index: 5, kind: output, shape index: {}]
  %s6 = sld [smem:[#allocation0]]
  $region46: #{tpu_custom_call.1} parent=0
    _
  %s8 = ssub.s32 1, %s6
  %s9 = scalar_select 0, %s8, %s6
  $region1: #{tpu_custom_call.1} parent=0
    #allocation3 [shape = 'u8[8192]{0}', space=vmem, size = 0x2000, scoped, tag = 'input window, operand 0, single buffered']
    #allocation4 [shape = 's32[1]{0}', space=sflag, size = 0x4, scoped, tag = 'scoped memory for tpu_custom_call.1']
    #allocation5 [shape = 's32[1]{0}', space=sflag, size = 0x4, scoped, tag = 'scoped memory for tpu_custom_call.1']
    #allocation6 [shape = 'u8[512]{0}', space=vmem, size = 0x400, scoped, tag = 'input window, operand 2, single buffered']
    #allocation7 [shape = 's32[1]{0}', space=sflag, size = 0x4, scoped, tag = 'scoped memory for tpu_custom_call.1']
    #allocation8 [shape = 'u8[32768]{0}', space=vmem, size = 0x8000, scoped, tag = 'input window, operand 3, single buffered']
    #allocation9 [shape = 'u8[8192]{0}', space=vmem, size = 0x2000, scoped, tag = 'output window, operand 0, single buffered']
    %10 = vsyncpa [#allocation4], 0
    %11 = vsyncpa [#allocation7], 0
    %12 = vsyncpa [#allocation5], 0
    // Predicated region
    $region2: #{tpu_custom_call.1} parent=1 // pred_check
      _
    $region3: #{tpu_custom_call.1} parent=1 // pred_check_branch
      %14 = sbr.rel (0) target = $region5
    $region4: #{tpu_custom_call.1} parent=1 // pred_region
      %s16 = ssub.s32 256, 256
      %17 = vsyncadd [#allocation4], %s16
      %s18 = sshll.u32 [#allocation3], 4
      %s19 = int_to_ptr.vmem [resolvable:$true] %s18
      %24 = dma.hbm_to_vmem [thread:$0]  %s0, 256, %s19, [#allocation4], 128, 128, 8
    $region5: #{tpu_custom_call.1} parent=1 // pred_fallthru
      _
    // Predicated region
    $region6: #{tpu_custom_call.1} parent=1 // pred_check
      _
    $region7: #{tpu_custom_call.1} parent=1 // pred_check_branch
      %26 = sbr.rel (0) target = $region9
    $region8: #{tpu_custom_call.1} parent=1 // pred_region
      _
    $region9: #{tpu_custom_call.1} parent=1 // pred_fallthru
      _
    // Predicated region
    $region10: #{tpu_custom_call.1} parent=1 // pred_check
      _
    $region11: #{tpu_custom_call.1} parent=1 // pred_check_branch
      %28 = sbr.rel (0) target = $region13
    $region12: #{tpu_custom_call.1} parent=1 // pred_region
      %s30 = ssub.s32 16, 16
      %31 = vsyncadd [#allocation7], %s30
      %s33 = sshll.u32 [#allocation6], 4
      %s34 = int_to_ptr.vmem [resolvable:$true] %s33
      %36 = dma.hbm_to_vmem [thread:$0]  %s2, 16, %s34, [#allocation7]
    $region13: #{tpu_custom_call.1} parent=1 // pred_fallthru
      _
    // Predicated region
    $region14: #{tpu_custom_call.1} parent=1 // pred_check
      _
    $region15: #{tpu_custom_call.1} parent=1 // pred_check_branch
      %38 = sbr.rel (0) target = $region17
    $region16: #{tpu_custom_call.1} parent=1 // pred_region
      %s40 = ssub.s32 1024, 1024
      %41 = vsyncadd [#allocation7], %s40
      %s42 = sshll.u32 [#allocation8], 4
      %s43 = int_to_ptr.vmem [resolvable:$true] %s42
      %48 = dma.hbm_to_vmem [thread:$0]  %s3, 1024, %s43, [#allocation7], 128, 128, 8
    $region17: #{tpu_custom_call.1} parent=1 // pred_fallthru
      _
    // Predicated region
    $region18: #{tpu_custom_call.1} parent=1 // pred_check
      _
    $region19: #{tpu_custom_call.1} parent=1 // pred_check_branch
      %50 = sbr.rel (0) target = $region21
    $region20: #{tpu_custom_call.1} parent=1 // pred_region
      _
    $region21: #{tpu_custom_call.1} parent=1 // pred_fallthru
      _
    // Predicated region
    $region22: #{tpu_custom_call.1} parent=1 // pred_check
      _
    $region23: #{tpu_custom_call.1} parent=1 // pred_check_branch
      %52 = sbr.rel (0) target = $region25
    $region24: #{tpu_custom_call.1} parent=1 // pred_region
      %53 = dma.done [#allocation4], 256
    $region25: #{tpu_custom_call.1} parent=1 // pred_fallthru
      _
    // Predicated region
    $region26: #{tpu_custom_call.1} parent=1 // pred_check
      _
    $region27: #{tpu_custom_call.1} parent=1 // pred_check_branch
      %55 = sbr.rel (0) target = $region29
    $region28: #{tpu_custom_call.1} parent=1 // pred_region
      %56 = dma.done [#allocation7], 16
    $region29: #{tpu_custom_call.1} parent=1 // pred_fallthru
      _
    // Predicated region
    $region30: #{tpu_custom_call.1} parent=1 // pred_check
      _
    $region31: #{tpu_custom_call.1} parent=1 // pred_check_branch
      %58 = sbr.rel (0) target = $region33
    $region32: #{tpu_custom_call.1} parent=1 // pred_region
      %59 = dma.done [#allocation7], 1024
    $region33: #{tpu_custom_call.1} parent=1 // pred_fallthru
      _
    %p61 = scmp.eq.s32.totalorder 0, 0
    // Predicated region
    $region34: #{tpu_custom_call.1} parent=1 // pred_check
      %p62 = pneg %p61
    $region35: #{tpu_custom_call.1} parent=1 // pred_check_branch
      %64 = sbr.rel (%p62) target = $region37
    $region36: #{tpu_custom_call.1} parent=1 // pred_region
      %v65 = vld [vmem:[#allocation3] sm:$0xff]
      %v66 = vld [vmem:[#allocation3 + $0x8] sm:$0xff]
      %vm67 = vcmask 523264
      %v68 = vsel %vm67, %v65, 0.0
      %69 = vadd.xlane.f32.xlu0 %v68
      %v70 = vpop.xlane.xlu0 %69
      %v71 = vsel %vm67, %v66, 0.0
      %72 = vadd.xlane.f32.xlu0 %v71
      %v73 = vpop.xlane.xlu0 %72
      %v74 = vrcp.pop 64.0
      %v75 = vmul.f32 %v70, %v74
      %v76 = vmul.f32 %v73, %v74
      %v77 = vsub.f32 %v65, %v75
      %v78 = vsub.f32 %v66, %v76
      %v79 = vmul.f32 %v77, %v77
      %v80 = vmul.f32 %v78, %v78
      %v81 = vsel %vm67, %v79, 0.0
      %82 = vadd.xlane.f32.xlu0 %v81
      %v83 = vpop.xlane.xlu0 %82
      %v84 = vsel %vm67, %v80, 0.0
      %85 = vadd.xlane.f32.xlu0 %v84
      %v86 = vpop.xlane.xlu0 %85
      %v87 = vmul.f32 %v83, %v74
      %v88 = vmul.f32 %v86, %v74
      %v89 = vadd.f32 %v87, 1e-05
      %v90 = vadd.f32 %v88, 1e-05
      %v91 = vrsqrt.pop %v89
      %v92 = vrsqrt.pop %v90
      %v93 = vmul.f32 %v77, %v91
      %v94 = vmul.f32 %v78, %v92
      %v95 = vld [vmem:[%s1] sm:$0x1]
      %v97 = vlaneseq
      %v98 = vshrl.u32 %v97, 7
      %v99 = vsub.s32 0, %v98
      %v100 = vrot.slane %v95, %v99
      %v102 = vmul.f32 %v93, %v100
      %v103 = vmul.f32 %v94, %v100
      %v104 = vld [vmem:[#allocation6] sm:$0x1]
      %v106 = vlaneseq
      %v107 = vshrl.u32 %v106, 7
      %v108 = vsub.s32 0, %v107
      %v109 = vrot.slane %v104, %v108
      %v111 = vadd.f32 %v102, %v109
      %v112 = vadd.f32 %v103, %v109
      %v113 = vpack.c.bf16 %v112, %v111
      %v115 = vunpack.c.l.b16 %v113
      %v116 = vunpack.c.h.b16 %v113
      %v117 = vpack.c.b16 %v115, %v115
      %v118 = vpack.c.b16 %v116, %v116
      %vm121 = vcmask 519168
      %122 = vst.msk [vmem:[#allocation2] sm:$0xf] %vm121, %v117
      %123 = vst.msk [vmem:[#allocation2 + $0x4] sm:$0xf] %vm121, %v118
    $region37: #{tpu_custom_call.1} parent=1 // pred_fallthru
      _
    %v124 = vld [vmem:[#allocation2] sm:$0xf]
    %v125 = vld [vmem:[#allocation2 + $0x4] sm:$0xf]
    %v126 = vld [vmem:[#allocation8] sm:$0xff]
    %v127 = vld [vmem:[#allocation8 + $0x8] sm:$0xff]
    %v128 = vld [vmem:[#allocation8 + $0x10] sm:$0xff]
    %v129 = vld [vmem:[#allocation8 + $0x18] sm:$0xff]
    %v130 = vld [vmem:[#allocation8 + $0x20] sm:$0xff]
    %v131 = vld [vmem:[#allocation8 + $0x28] sm:$0xff]
    %v132 = vld [vmem:[#allocation8 + $0x30] sm:$0xff]
    %v133 = vld [vmem:[#allocation8 + $0x38] sm:$0xff]
    %v134 = vld [vmem:[%s4] sm:$0x3]
    %v136 = vlaneseq
    %v137 = vshrl.u32 %v136, 7
    %v138 = vsub.s32 0, %v137
    %v139 = vrot.slane %v134, %v138
    %v140 = vlaneseq
    %v141 = vshrl.u32 %v140, 7
    %v142 = vsub.s32 1, %v141
    %v143 = vrot.slane %v134, %v142
    %v148 = vunpack.c.l.b16 %v124
    %v149 = vunpack.c.l.b16 %v125
    %v150 = vpack.c.b16 %v149, %v148
    %v159 = vunpack.c.l.b16 %v126
    %v160 = vunpack.c.h.b16 %v126
    %v161 = vunpack.c.l.b16 %v127
    %v162 = vunpack.c.h.b16 %v127
    %v163 = vunpack.c.l.b16 %v128
    %v164 = vunpack.c.h.b16 %v128
    %v165 = vunpack.c.l.b16 %v129
    %v166 = vunpack.c.h.b16 %v129
    %v167 = vunpack.c.l.b16 %v130
    %v168 = vunpack.c.h.b16 %v130
    %v169 = vunpack.c.l.b16 %v131
    %v170 = vunpack.c.h.b16 %v131
    %v171 = vunpack.c.l.b16 %v132
    %v172 = vunpack.c.h.b16 %v132
    %v173 = vunpack.c.l.b16 %v133
    %v174 = vunpack.c.h.b16 %v133
    %v175 = vpack.c.b16 %v161, %v159
    %v176 = vpack.c.b16 %v162, %v160
    %v177 = vpack.c.b16 %v165, %v163
    %v178 = vpack.c.b16 %v166, %v164
    %v179 = vpack.c.b16 %v169, %v167
    %v180 = vpack.c.b16 %v170, %v168
    %v181 = vpack.c.b16 %v173, %v171
    %v182 = vpack.c.b16 %v174, %v172
    %vm191 = vcmask 523264
    %v193 = vsel %vm191, %v150, 0
    %195 = vmatprep.subr.bf16.mxu0 0
    %196 = vmatpush1.bf16.msra.mxu0 0
    %197 = vmatprep.subr.bf16.mxu0 0
    %198 = vmatpush1.bf16.msra.mxu0 0
    %199 = vmatprep.subr.bf16.mxu0 0
    %200 = vmatpush1.bf16.msra.mxu0 0
    %201 = vmatprep.subr.bf16.mxu0 0
    %202 = vmatpush1.bf16.msra.mxu0 0
    %203 = vmatprep.subr.bf16.mxu0 %v182
    %204 = vmatpush1.bf16.msra.mxu0 %v181
    %205 = vmatprep.subr.bf16.mxu0 %v180
    %206 = vmatpush1.bf16.msra.mxu0 %v179
    %207 = vmatprep.subr.bf16.mxu0 %v178
    %208 = vmatpush1.bf16.msra.mxu0 %v177
    %209 = vmatprep.subr.bf16.mxu0 %v176
    %210 = vmatpush1.bf16.msra.mxu0 %v175
    %211 = vmatprep.subr.bf16.mxu0 0
    %212 = vmatpush2.bf16.msra.mxu0 0
    %213 = vmatprep.subr.bf16.mxu0 0
    %214 = vmatpush2.bf16.msra.mxu0 0
    %215 = vmatprep.subr.bf16.mxu0 0
    %216 = vmatpush2.bf16.msra.mxu0 0
    %217 = vmatprep.subr.bf16.mxu0 0
    %218 = vmatpush2.bf16.msra.mxu0 0
    %219 = vmatprep.subr.bf16.mxu0 0
    %220 = vmatpush2.bf16.msra.mxu0 0
    %221 = vmatprep.subr.bf16.mxu0 0
    %222 = vmatpush2.bf16.msra.mxu0 0
    %223 = vmatprep.subr.bf16.mxu0 0
    %224 = vmatpush2.bf16.msra.mxu0 0
    %225 = vmatprep.subr.bf16.mxu0 0
    %226 = vmatpush2.bf16.msra.mxu0 0
    %227 = vmatprep.mubr.bf16.mxu0 0
    %228 = vmatmul.mubr.bf16.gmra.mxu0 %v193
    %v229 = vpop.f32.mrf.mxu0
    %v230 = vadd.f32 %v139, %v229
    %v231 = vpop.f32.mrf.mxu0
    %v232 = vadd.f32 %v143, %v231
    %v233 = vpop.f32.mrf.mxu0
    %v234 = vadd.f32 %v139, %v233
    %v235 = vpop.f32.mrf.mxu0
    %v236 = vadd.f32 %v143, %v235
    %237 = vdwg.mxu0
    %v238 = vpack.c.bf16 %v234, %v230
    %v239 = vpack.c.bf16 %v236, %v232
    %v242 = vunpack.c.l.b16 %v238
    %v243 = vunpack.c.l.b16 %v239
    %v244 = vunpack.c.h.b16 %v238
    %v245 = vunpack.c.h.b16 %v239
    %v246 = vpack.c.b16 %v243, %v242
    %v247 = vpack.c.b16 %v245, %v244
    %vm250 = vcmask 1043456
    %vm251 = vcmask 523268
    %vm252 = vmor %vm251, %vm250
    %253 = vst.msk [vmem:[#allocation9] sm:$0xff] %vm252, %v246
    %254 = vst.msk [vmem:[#allocation9 + $0x8] sm:$0xff] %vm252, %v247
    // Predicated region
    $region38: #{tpu_custom_call.1} parent=1 // pred_check
      _
    $region39: #{tpu_custom_call.1} parent=1 // pred_check_branch
      %256 = sbr.rel (0) target = $region41
    $region40: #{tpu_custom_call.1} parent=1 // pred_region
      %s258 = ssub.s32 256, 256
      %259 = vsyncadd [#allocation5], %s258
      %s260 = sshll.u32 [#allocation9], 4
      %s261 = int_to_ptr.vmem [resolvable:$true] %s260
      %266 = dma.vmem_to_hbm [thread:$0]  %s261, 256, %s5, [#allocation5], 128, 128, 8
    $region41: #{tpu_custom_call.1} parent=1 // pred_fallthru
      _
    // Predicated region
    $region42: #{tpu_custom_call.1} parent=1 // pred_check
      _
    $region43: #{tpu_custom_call.1} parent=1 // pred_check_branch
      %268 = sbr.rel (0) target = $region45
    $region44: #{tpu_custom_call.1} parent=1 // pred_region
      %269 = dma.done [#allocation5], 256
    $region45: #{tpu_custom_call.1} parent=1 // pred_fallthru
      _
    %270 = vsyncpa [#allocation4], 1
    %271 = vsyncpa [#allocation7], 1
    %272 = vsyncpa [#allocation5], 1

</llo_original>
